<compile_context>
chip_gen: v6e
topology: v6e:2x2x1
jax: 0.10.0
libtpu: 0.0.40
codegen_flags: <defaults>
</compile_context>

<pallas_src>
import functools
import random

import jax
import jax.numpy as jnp
from jax.experimental import pallas as pl
from jax.experimental.pallas import tpu as pltpu

MARGIN = 0.2
LOCAL_HUNG_P = 0.25
PAIRWISE_EPS = 1e-6  # torch F.pairwise_distance default eps (added to the difference)


def _triplet_kernel(sinfo_ref,             # SMEM int32[2] = [shift // tb, shift % tb]
                    pos_ref, neg_ref,      # (tb, L) f32
                    doc_ref, q_ref,        # (tb, D) f32
                    qra_ref, qrb_ref,      # (tb, D) f32 rolled-query source blocks
                    out_ref,               # (8, 128) f32 per-core partial-sum block
                    stack_ref,             # VMEM (2*tb, D) f32 scratch
                    acc_ref,               # SMEM f32[2]: [sum_local, sum_triplet]
                    *, margin, eps, tb):
    j = pl.program_id(1)

    @pl.when(j == 0)
    def _init():
        acc_ref[0] = 0.0
        acc_ref[1] = 0.0
        out_ref[...] = jnp.zeros_like(out_ref)

    # ---- local hungarian term: running SUM of relu(pos - neg + margin) ----
    local = jnp.maximum(pos_ref[...] - neg_ref[...] + margin, 0.0)
    acc_ref[0] += jnp.sum(local)

    # ---- rolled-query window for this row block ----
    # Rolled row (blk*tb + i) needs query[(blk*tb + i - shift) % B].  With
    # shift = a*tb + r, the qra/qrb BlockSpecs already DMA'd query blocks
    # (blk - a - 1) % nb and (blk - a) % nb.  Rows [tb - r, 2*tb - r) of their stack
    # are exactly the rolled window -> one dynamic slice, no rotation needed.
    r = sinfo_ref[1]
    stack_ref[:tb, :] = qra_ref[...]
    stack_ref[tb:, :] = qrb_ref[...]
    rolled = stack_ref[pl.ds(tb - r, tb), :]                          # (tb, D)

    # ---- global triplet-margin term: running SUM of relu(d_ap - d_an + margin) ----
    doc = doc_ref[...]
    dp = doc - q_ref[...] + eps
    dn = doc - rolled + eps
    d_ap = jnp.sqrt(jnp.sum(dp * dp, axis=-1, keepdims=True))         # (tb, 1)
    d_an = jnp.sqrt(jnp.sum(dn * dn, axis=-1, keepdims=True))         # (tb, 1)
    acc_ref[1] += jnp.sum(jnp.maximum(d_ap - d_an + margin, 0.0))

    # ---- finalize: publish this core's partials (row 0: local sum, row 1: triplet sum)
    @pl.when(j == pl.num_programs(1) - 1)
    def _finalize():
        out_ref[0:1, :] = jnp.full((1, 128), acc_ref[0], dtype=jnp.float32)
        out_ref[1:2, :] = jnp.full((1, 128), acc_ref[1], dtype=jnp.float32)


def _vmem_limit_bytes():
    """Per-generation scoped-VMEM limit (v7x: 64 MiB/TC physical; v5e/v6e: 128 MiB)."""
    try:
        cap = int(pltpu.get_tpu_info().vmem_capacity_bytes)
    except Exception:
        cap = 64 * 1024 * 1024  # conservative fallback = v7x per-core VMEM
    return int(min((cap * 3) // 4, 96 * 1024 * 1024))


def _pick_block_rows(b, l, d, tile_budget_bytes):
    """Largest row tile that (a) divides B, (b) is a multiple of 8 (or the full B),
    (c) keeps 6 double-buffered input streams + the (2*tb, D) scratch inside the VMEM
    budget, and (d) targets ~4 MiB streamed per step to amortize grid overhead."""
    stream_bytes_per_row = 4 * (2 * l + 4 * d)                   # HBM bytes per row/step
    resident_bytes_per_row = 4 * (2 * (2 * l + 4 * d) + 2 * d)   # dbl-buffered + scratch
    target_rows = max(512, (4 * 1024 * 1024) // max(stream_bytes_per_row, 1))
    max_rows_by_vmem = max(8, tile_budget_bytes // max(resident_bytes_per_row, 1))
    limit = max(1, min(b, target_rows, max_rows_by_vmem))
    for cand in range(limit, 0, -1):
        if b % cand == 0 and (cand % 8 == 0 or cand == b):
            return cand
    # TODO(synk): mask a non-divisor tail block instead of falling back to the full batch.
    return b


def triplet_loss(local_pos_dist, local_neg_dist, doc_embs, query_embs, shift):
    """Pallas TripletLoss forward.  `shift` is a runtime scalar (scalar-prefetch arg),
    so drawing a new random shift does NOT trigger recompilation."""
    B, L = local_pos_dist.shape
    B2, D = doc_embs.shape
    assert B == B2 == query_embs.shape[0]

    vmem_limit = _vmem_limit_bytes()
    tb = _pick_block_rows(B, L, D, vmem_limit // 2)
    nb = B // tb
    # Leading "parallel" axis: shard batch blocks across the two v7x TensorCores
    # (serial and near-free on single-core v5e/v6e).
    ncs = 2 if (nb % 2 == 0 and nb >= 2) else 1
    nbc = nb // ncs

    shift = jnp.asarray(shift, dtype=jnp.int32)
    sinfo = jnp.stack([shift // tb, shift % tb]).astype(jnp.int32)    # [a, r]

    kernel = functools.partial(_triplet_kernel, margin=MARGIN, eps=PAIRWISE_EPS, tb=tb)

    row_map = lambda c, j, s: (c * nbc + j, 0)
    # shift = a*tb + r -> rolled window of batch block (c*nbc + j) lives in query blocks
    # (blk - a - 1) % nb and (blk - a) % nb.  (+2*nb keeps the dividend non-negative.)
    qra_map = lambda c, j, s: ((c * nbc + j - s[0] - 1 + 2 * nb) % nb, 0)
    qrb_map = lambda c, j, s: ((c * nbc + j - s[0] + 2 * nb) % nb, 0)

    grid_spec = pltpu.PrefetchScalarGridSpec(
        num_scalar_prefetch=1,
        grid=(ncs, nbc),
        in_specs=[
            pl.BlockSpec((tb, L), row_map),     # local_pos_dist
            pl.BlockSpec((tb, L), row_map),     # local_neg_dist
            pl.BlockSpec((tb, D), row_map),     # doc_embs
            pl.BlockSpec((tb, D), row_map),     # query_embs (anchor/positive)
            pl.BlockSpec((tb, D), qra_map),     # query_embs (rolled source, block A)
            pl.BlockSpec((tb, D), qrb_map),     # query_embs (rolled source, block B)
        ],
        out_specs=pl.BlockSpec((8, 128), lambda c, j, s: (c, 0)),
        scratch_shapes=[
            pltpu.VMEM((2 * tb, D), jnp.float32),   # stacked rolled-query source
            pltpu.SMEM((2,), jnp.float32),          # [sum_local, sum_triplet]
        ],
    )

    partials = pl.pallas_call(
        kernel,
        out_shape=jax.ShapeDtypeStruct((ncs * 8, 128), jnp.float32),
        grid_spec=grid_spec,
        compiler_params=pltpu.CompilerParams(
            dimension_semantics=("parallel", "arbitrary"),
            vmem_limit_bytes=vmem_limit,
        ),
    )(sinfo, local_pos_dist, local_neg_dist, doc_embs, query_embs,
      query_embs, query_embs)

    # Cross-core combine + final weighting (tiny, done in the wrapper).
    sum_local = jnp.sum(partials[0::8, 0])
    sum_trip = jnp.sum(partials[1::8, 0])
    return (LOCAL_HUNG_P * sum_local / float(B * L)
            + (1.0 - LOCAL_HUNG_P) * sum_trip / float(B))


def triplet_loss_ref(local_pos_dist, local_neg_dist, doc_embs, query_embs, *, shift):
    """Pure-JAX reference mirroring the PyTorch forward (for correctness check)."""
    local = jnp.maximum(local_pos_dist - local_neg_dist + MARGIN, 0.0)
    rolled = jnp.roll(query_embs, shift, axis=0)
    d_ap = jnp.linalg.norm(doc_embs - query_embs + PAIRWISE_EPS, axis=-1)
    d_an = jnp.linalg.norm(doc_embs - rolled + PAIRWISE_EPS, axis=-1)
    trip = jnp.mean(jnp.maximum(d_ap - d_an + MARGIN, 0.0))
    return LOCAL_HUNG_P * jnp.mean(local) + (1.0 - LOCAL_HUNG_P) * trip


if __name__ == "__main__":
    B, L, D = 8, 16, 32

    key = jax.random.PRNGKey(0)
    k1, k2, k3, k4 = jax.random.split(key, 4)
    local_pos = jax.random.uniform(k1, (B, L), dtype=jnp.float32)
    local_neg = jax.random.uniform(k2, (B, L), dtype=jnp.float32)
    doc_embs = jax.random.normal(k3, (B, D), dtype=jnp.float32)
    query_embs = jax.random.normal(k4, (B, D), dtype=jnp.float32)

    # Deterministic stand-in for random.randint(1, B-1) drawn inside forward().
    random.seed(0)
    rand_shift = random.randint(1, B - 1)

    triplet_fn = jax.jit(triplet_loss)   # shift is traced -> one compile for all shifts

    for s in sorted({rand_shift, 1, B - 1}):
        out = jax.block_until_ready(
            triplet_fn(local_pos, local_neg, doc_embs, query_embs, s))
        ref = jax.block_until_ready(
            triplet_loss_ref(local_pos, local_neg, doc_embs, query_embs, shift=s))
        assert jnp.allclose(out, ref, rtol=1e-5, atol=1e-5), (s, out, ref)

    print("KERNEL_OK")
</pallas_src>

<mosaic_0001>
module attributes {stable_mosaic.version = 11 : i64} {
  func.func @_triplet_kernel(%arg0: i32, %arg1: i32, %arg2: memref<2xi32, #tpu.memory_space<smem>>, %arg3: memref<8x16xf32, #tpu.memory_space<vmem>>, %arg4: memref<8x16xf32, #tpu.memory_space<vmem>>, %arg5: memref<8x32xf32, #tpu.memory_space<vmem>>, %arg6: memref<8x32xf32, #tpu.memory_space<vmem>>, %arg7: memref<8x32xf32, #tpu.memory_space<vmem>>, %arg8: memref<8x32xf32, #tpu.memory_space<vmem>>, %arg9: memref<8x128xf32, #tpu.memory_space<vmem>>, %arg10: memref<16x32xf32, #tpu.memory_space<vmem>>, %arg11: memref<2xf32, #tpu.memory_space<smem>>) attributes {dimension_semantics = [#tpu.dimension_semantics<parallel>, #tpu.dimension_semantics<arbitrary>], iteration_bounds = array<i64: 1, 1>, scalar_prefetch = 1 : i64, scratch_operands = 2 : i64, tpu.core_type = #tpu.core_type<tc>, window_params = [{transform_indices = @transform_0, window_bounds = array<i64: 8, 16>}, {transform_indices = @transform_1, window_bounds = array<i64: 8, 16>}, {transform_indices = @transform_2, window_bounds = array<i64: 8, 32>}, {transform_indices = @transform_3, window_bounds = array<i64: 8, 32>}, {transform_indices = @transform_4, window_bounds = array<i64: 8, 32>}, {transform_indices = @transform_5, window_bounds = array<i64: 8, 32>}, {transform_indices = @transform_6, window_bounds = array<i64: 8, 128>}]} {
    %c0_i32 = arith.constant 0 : i32
    %0 = arith.cmpi eq, %arg1, %c0_i32 : i32
    %1 = arith.extui %0 : i1 to i32
    %c0_i32_0 = arith.constant 0 : i32
    %2 = arith.cmpi ne, %1, %c0_i32_0 : i32
    scf.if %2 {
      %cst_31 = arith.constant 0.000000e+00 : f32
      %c0_32 = arith.constant 0 : index
      %56 = memref.load %arg11[%c0_32] : memref<2xf32, #tpu.memory_space<smem>>
      memref.store %cst_31, %arg11[%c0_32] : memref<2xf32, #tpu.memory_space<smem>>
      %cst_33 = arith.constant 0.000000e+00 : f32
      %c1_34 = arith.constant 1 : index
      %57 = memref.load %arg11[%c1_34] : memref<2xf32, #tpu.memory_space<smem>>
      memref.store %cst_33, %arg11[%c1_34] : memref<2xf32, #tpu.memory_space<smem>>
      %cst_35 = arith.constant 0.000000e+00 : f32
      %58 = vector.broadcast %cst_35 : f32 to vector<8x128xf32>
      %c0_36 = arith.constant 0 : index
      %c0_37 = arith.constant 0 : index
      %59 = vector.load %arg9[%c0_36, %c0_37] : memref<8x128xf32, #tpu.memory_space<vmem>>, vector<8x128xf32>
      tpu.vector_store %arg9[%c0_36, %c0_37], %58 {strides = array<i32>} : memref<8x128xf32, #tpu.memory_space<vmem>>, vector<8x128xf32>,
    } else {
    }
    %c0 = arith.constant 0 : index
    %c0_1 = arith.constant 0 : index
    %3 = vector.load %arg3[%c0, %c0_1] : memref<8x16xf32, #tpu.memory_space<vmem>>, vector<8x16xf32>
    %c0_2 = arith.constant 0 : index
    %c0_3 = arith.constant 0 : index
    %4 = vector.load %arg4[%c0_2, %c0_3] : memref<8x16xf32, #tpu.memory_space<vmem>>, vector<8x16xf32>
    %5 = arith.subf %3, %4 : vector<8x16xf32>
    %cst = arith.constant 2.000000e-01 : f32
    %6 = vector.broadcast %cst : f32 to vector<8x16xf32>
    %7 = arith.addf %5, %6 : vector<8x16xf32>
    %cst_4 = arith.constant 0.000000e+00 : f32
    %8 = vector.broadcast %cst_4 : f32 to vector<8x16xf32>
    %9 = arith.maximumf %7, %8 : vector<8x16xf32>
    %c0_5 = arith.constant 0 : index
    %10 = memref.load %arg11[%c0_5] : memref<2xf32, #tpu.memory_space<smem>>
    %11 = vector.shape_cast %9 : vector<8x16xf32> to vector<1x8x16xf32>
    %cst_6 = arith.constant dense<0.000000e+00> : vector<1xf32>
    %12 = vector.multi_reduction <add>, %11, %cst_6 [1, 2] : vector<1x8x16xf32> to vector<1xf32>
    %13 = vector.shape_cast %12 : vector<1xf32> to vector<1x1x1xf32>
    %14 = vector.extract %13[0, 0, 0] : f32 from vector<1x1x1xf32>
    %15 = arith.addf %10, %14 : f32
    %c0_7 = arith.constant 0 : index
    %16 = memref.load %arg11[%c0_7] : memref<2xf32, #tpu.memory_space<smem>>
    memref.store %15, %arg11[%c0_7] : memref<2xf32, #tpu.memory_space<smem>>
    %c1 = arith.constant 1 : index
    %17 = memref.load %arg2[%c1] : memref<2xi32, #tpu.memory_space<smem>>
    %c0_8 = arith.constant 0 : index
    %c0_9 = arith.constant 0 : index
    %18 = vector.load %arg7[%c0_8, %c0_9] : memref<8x32xf32, #tpu.memory_space<vmem>>, vector<8x32xf32>
    %c0_10 = arith.constant 0 : index
    %c0_11 = arith.constant 0 : index
    %19 = vector.load %arg10[%c0_10, %c0_11] : memref<16x32xf32, #tpu.memory_space<vmem>>, vector<8x32xf32>
    tpu.vector_store %arg10[%c0_10, %c0_11], %18 {strides = array<i32>} : memref<16x32xf32, #tpu.memory_space<vmem>>, vector<8x32xf32>,
    %c0_12 = arith.constant 0 : index
    %c0_13 = arith.constant 0 : index
    %20 = vector.load %arg8[%c0_12, %c0_13] : memref<8x32xf32, #tpu.memory_space<vmem>>, vector<8x32xf32>
    %c8 = arith.constant 8 : index
    %c0_14 = arith.constant 0 : index
    %21 = vector.load %arg10[%c8, %c0_14] : memref<16x32xf32, #tpu.memory_space<vmem>>, vector<8x32xf32>
    tpu.vector_store %arg10[%c8, %c0_14], %20 {strides = array<i32>} : memref<16x32xf32, #tpu.memory_space<vmem>>, vector<8x32xf32>,
    %c8_i32 = arith.constant 8 : i32
    %22 = arith.subi %c8_i32, %17 : i32
    %23 = arith.index_cast %22 : i32 to index
    %c0_15 = arith.constant 0 : index
    %24 = vector.load %arg10[%23, %c0_15] : memref<16x32xf32, #tpu.memory_space<vmem>>, vector<8x32xf32>
    %c0_16 = arith.constant 0 : index
    %c0_17 = arith.constant 0 : index
    %25 = vector.load %arg5[%c0_16, %c0_17] : memref<8x32xf32, #tpu.memory_space<vmem>>, vector<8x32xf32>
    %c0_18 = arith.constant 0 : index
    %c0_19 = arith.constant 0 : index
    %26 = vector.load %arg6[%c0_18, %c0_19] : memref<8x32xf32, #tpu.memory_space<vmem>>, vector<8x32xf32>
    %27 = arith.subf %25, %26 : vector<8x32xf32>
    %cst_20 = arith.constant 9.99999997E-7 : f32
    %28 = vector.broadcast %cst_20 : f32 to vector<8x32xf32>
    %29 = arith.addf %27, %28 : vector<8x32xf32>
    %30 = arith.subf %25, %24 : vector<8x32xf32>
    %cst_21 = arith.constant 9.99999997E-7 : f32
    %31 = vector.broadcast %cst_21 : f32 to vector<8x32xf32>
    %32 = arith.addf %30, %31 : vector<8x32xf32>
    %33 = arith.mulf %29, %29 : vector<8x32xf32>
    %cst_22 = arith.constant dense<0.000000e+00> : vector<8xf32>
    %34 = vector.multi_reduction <add>, %33, %cst_22 [1] : vector<8x32xf32> to vector<8xf32>
    %35 = vector.shape_cast %34 : vector<8xf32> to vector<8x1xf32>
    %36 = math.sqrt %35 : vector<8x1xf32>
    %37 = arith.mulf %32, %32 : vector<8x32xf32>
    %cst_23 = arith.constant dense<0.000000e+00> : vector<8xf32>
    %38 = vector.multi_reduction <add>, %37, %cst_23 [1] : vector<8x32xf32> to vector<8xf32>
    %39 = vector.shape_cast %38 : vector<8xf32> to vector<8x1xf32>
    %40 = math.sqrt %39 : vector<8x1xf32>
    %c1_24 = arith.constant 1 : index
    %41 = memref.load %arg11[%c1_24] : memref<2xf32, #tpu.memory_space<smem>>
    %42 = arith.subf %36, %40 : vector<8x1xf32>
    %cst_25 = arith.constant 2.000000e-01 : f32
    %43 = vector.broadcast %cst_25 : f32 to vector<8x1xf32>
    %44 = arith.addf %42, %43 : vector<8x1xf32>
    %cst_26 = arith.constant 0.000000e+00 : f32
    %45 = vector.broadcast %cst_26 : f32 to vector<8x1xf32>
    %46 = arith.maximumf %44, %45 : vector<8x1xf32>
    %47 = vector.shape_cast %46 : vector<8x1xf32> to vector<1x8x1xf32>
    %cst_27 = arith.constant dense<0.000000e+00> : vector<1xf32>
    %48 = vector.multi_reduction <add>, %47, %cst_27 [1, 2] : vector<1x8x1xf32> to vector<1xf32>
    %49 = vector.shape_cast %48 : vector<1xf32> to vector<1x1x1xf32>
    %50 = vector.extract %49[0, 0, 0] : f32 from vector<1x1x1xf32>
    %51 = arith.addf %41, %50 : f32
    %c1_28 = arith.constant 1 : index
    %52 = memref.load %arg11[%c1_28] : memref<2xf32, #tpu.memory_space<smem>>
    memref.store %51, %arg11[%c1_28] : memref<2xf32, #tpu.memory_space<smem>>
    %c0_i32_29 = arith.constant 0 : i32
    %53 = arith.cmpi eq, %arg1, %c0_i32_29 : i32
    %54 = arith.extui %53 : i1 to i32
    %c0_i32_30 = arith.constant 0 : i32
    %55 = arith.cmpi ne, %54, %c0_i32_30 : i32
    scf.if %55 {
      %c0_31 = arith.constant 0 : index
      %56 = memref.load %arg11[%c0_31] : memref<2xf32, #tpu.memory_space<smem>>
      %57 = vector.broadcast %56 : f32 to vector<1x128xf32>
      %c0_32 = arith.constant 0 : index
      %c0_33 = arith.constant 0 : index
      %58 = vector.load %arg9[%c0_32, %c0_33] : memref<8x128xf32, #tpu.memory_space<vmem>>, vector<1x128xf32>
      tpu.vector_store %arg9[%c0_32, %c0_33], %57 {strides = array<i32>} : memref<8x128xf32, #tpu.memory_space<vmem>>, vector<1x128xf32>,
      %c1_34 = arith.constant 1 : index
      %59 = memref.load %arg11[%c1_34] : memref<2xf32, #tpu.memory_space<smem>>
      %60 = vector.broadcast %59 : f32 to vector<1x128xf32>
      %c1_35 = arith.constant 1 : index
      %c0_36 = arith.constant 0 : index
      %61 = vector.load %arg9[%c1_35, %c0_36] : memref<8x128xf32, #tpu.memory_space<vmem>>, vector<1x128xf32>
      tpu.vector_store %arg9[%c1_35, %c0_36], %60 {strides = array<i32>} : memref<8x128xf32, #tpu.memory_space<vmem>>, vector<1x128xf32>,
    } else {
    }
    return
  }
  func.func @transform_0(%arg0: i32, %arg1: i32, %arg2: memref<2xi32, #tpu.memory_space<smem>>) -> (i32, i32) {
    %c1_i32 = arith.constant 1 : i32
    %0 = arith.muli %arg0, %c1_i32 : i32
    %1 = arith.addi %0, %arg1 : i32
    %c0_i32 = arith.constant 0 : i32
    %c0_i32_0 = arith.constant 0 : i32
    return %1, %c0_i32 : i32, i32
  }
  func.func @transform_1(%arg0: i32, %arg1: i32, %arg2: memref<2xi32, #tpu.memory_space<smem>>) -> (i32, i32) {
    %c1_i32 = arith.constant 1 : i32
    %0 = arith.muli %arg0, %c1_i32 : i32
    %1 = arith.addi %0, %arg1 : i32
    %c0_i32 = arith.constant 0 : i32
    %c0_i32_0 = arith.constant 0 : i32
    return %1, %c0_i32 : i32, i32
  }
  func.func @transform_2(%arg0: i32, %arg1: i32, %arg2: memref<2xi32, #tpu.memory_space<smem>>) -> (i32, i32) {
    %c1_i32 = arith.constant 1 : i32
    %0 = arith.muli %arg0, %c1_i32 : i32
    %1 = arith.addi %0, %arg1 : i32
    %c0_i32 = arith.constant 0 : i32
    %c0_i32_0 = arith.constant 0 : i32
    return %1, %c0_i32 : i32, i32
  }
  func.func @transform_3(%arg0: i32, %arg1: i32, %arg2: memref<2xi32, #tpu.memory_space<smem>>) -> (i32, i32) {
    %c1_i32 = arith.constant 1 : i32
    %0 = arith.muli %arg0, %c1_i32 : i32
    %1 = arith.addi %0, %arg1 : i32
    %c0_i32 = arith.constant 0 : i32
    %c0_i32_0 = arith.constant 0 : i32
    return %1, %c0_i32 : i32, i32
  }
  func.func @transform_4(%arg0: i32, %arg1: i32, %arg2: memref<2xi32, #tpu.memory_space<smem>>) -> (i32, i32) {
    %c1_i32 = arith.constant 1 : i32
    %0 = arith.muli %arg0, %c1_i32 : i32
    %1 = arith.addi %0, %arg1 : i32
    %c0 = arith.constant 0 : index
    %2 = memref.load %arg2[%c0] : memref<2xi32, #tpu.memory_space<smem>>
    %3 = arith.subi %1, %2 : i32
    %c1_i32_0 = arith.constant 1 : i32
    %4 = arith.subi %3, %c1_i32_0 : i32
    %c2_i32 = arith.constant 2 : i32
    %5 = arith.addi %4, %c2_i32 : i32
    %c1_i32_1 = arith.constant 1 : i32
    %c0_i32 = arith.constant 0 : i32
    %6 = arith.cmpi eq, %c1_i32_1, %c0_i32 : i32
    %c1_i32_2 = arith.constant 1 : i32
    %7 = arith.select %6, %c1_i32_2, %c1_i32_1 : i32
    %8 = arith.remsi %5, %7 : i32
    %c0_i32_3 = arith.constant 0 : i32
    %9 = arith.cmpi ne, %8, %c0_i32_3 : i32
    %c0_i32_4 = arith.constant 0 : i32
    %10 = arith.cmpi slt, %8, %c0_i32_4 : i32
    %c0_i32_5 = arith.constant 0 : i32
    %11 = arith.cmpi slt, %7, %c0_i32_5 : i32
    %12 = arith.xori %10, %11 : i1
    %13 = arith.andi %12, %9 : i1
    %14 = arith.addi %8, %7 : i32
    %15 = arith.select %13, %14, %8 : i32
    %c0_i32_6 = arith.constant 0 : i32
    %c0_i32_7 = arith.constant 0 : i32
    return %15, %c0_i32_6 : i32, i32
  }
  func.func @transform_5(%arg0: i32, %arg1: i32, %arg2: memref<2xi32, #tpu.memory_space<smem>>) -> (i32, i32) {
    %c1_i32 = arith.constant 1 : i32
    %0 = arith.muli %arg0, %c1_i32 : i32
    %1 = arith.addi %0, %arg1 : i32
    %c0 = arith.constant 0 : index
    %2 = memref.load %arg2[%c0] : memref<2xi32, #tpu.memory_space<smem>>
    %3 = arith.subi %1, %2 : i32
    %c2_i32 = arith.constant 2 : i32
    %4 = arith.addi %3, %c2_i32 : i32
    %c1_i32_0 = arith.constant 1 : i32
    %c0_i32 = arith.constant 0 : i32
    %5 = arith.cmpi eq, %c1_i32_0, %c0_i32 : i32
    %c1_i32_1 = arith.constant 1 : i32
    %6 = arith.select %5, %c1_i32_1, %c1_i32_0 : i32
    %7 = arith.remsi %4, %6 : i32
    %c0_i32_2 = arith.constant 0 : i32
    %8 = arith.cmpi ne, %7, %c0_i32_2 : i32
    %c0_i32_3 = arith.constant 0 : i32
    %9 = arith.cmpi slt, %7, %c0_i32_3 : i32
    %c0_i32_4 = arith.constant 0 : i32
    %10 = arith.cmpi slt, %6, %c0_i32_4 : i32
    %11 = arith.xori %9, %10 : i1
    %12 = arith.andi %11, %8 : i1
    %13 = arith.addi %7, %6 : i32
    %14 = arith.select %12, %13, %7 : i32
    %c0_i32_5 = arith.constant 0 : i32
    %c0_i32_6 = arith.constant 0 : i32
    return %14, %c0_i32_5 : i32, i32
  }
  func.func @transform_6(%arg0: i32, %arg1: i32, %arg2: memref<2xi32, #tpu.memory_space<smem>>) -> (i32, i32) {
    %c0_i32 = arith.constant 0 : i32
    %c0_i32_0 = arith.constant 0 : i32
    return %arg0, %c0_i32 : i32, i32
  }
}

</mosaic_0001>

<llo_original>
// kernel: triplet_loss.1
$region0: #{triplet_loss.1}
  #allocation0 [shape = 'u32[]', space=smem, size = 0x4, offset = 0x4, fixed_abs, tag = 'smem constant byte address 0x4 - core index']
  #allocation1 [shape = 'u32[144,128]{1,0:T(1,128)}', space=vmem, size = 0x12000, scoped, tag = 'internal scratch']
  #allocation2 [shape = 'f32[16,32]{1,0:T(8,128)}', space=vmem, size = 0x2000, scoped, tag = 'scratch operand']
  #allocation3 [shape = 'f32[2]{0:T(128)}', space=smem, size = 0x200, scoped, tag = 'scratch operand']
  #allocation4 [shape = 's32[1]{0}', space=sflag, size = 0x4, scoped, tag = 'scoped memory for triplet_loss.1']
  #allocation5 [shape = 'u8[512]{0}', space=smem, size = 0x200, scoped, tag = 'prefetched SMEM operand 0']
  %s0 = inlined_call_operand.vmem [shape: s32[2], index: 0, kind: input, shape index: {}]
  %s1 = inlined_call_operand.vmem [shape: f32[8,16], index: 1, kind: input, shape index: {}]
  %s2 = inlined_call_operand.vmem [shape: f32[8,16], index: 2, kind: input, shape index: {}]
  %s3 = inlined_call_operand.vmem [shape: f32[8,32], index: 3, kind: input, shape index: {}]
  %s4 = inlined_call_operand.vmem [shape: f32[8,32], index: 4, kind: input, shape index: {}, may-alias: {4,5,6}]
  %s5 = inlined_call_operand.vmem [shape: f32[8,32], index: 5, kind: input, shape index: {}, may-alias: {4,5,6}]
  %s6 = inlined_call_operand.vmem [shape: f32[8,32], index: 6, kind: input, shape index: {}, may-alias: {4,5,6}]
  %s7 = inlined_call_operand.vmem [shape: f32[8,128], index: 7, kind: output, shape index: {}]
  %s8 = sld [smem:[#allocation0]]
  $region42: #{triplet_loss.1} parent=0
    _
  %s10 = ssub.s32 1, %s8
  %s11 = scalar_select 0, %s10, %s8
  %s12 = sshll.u32 %s0, 4
  %s13 = int_to_ptr.vmem [resolvable:$true] %s12
  %15 = dma.vmem_to_smem %s13, 16, [#allocation5], [#allocation4]
  %16 = dma.done [#allocation4], 16
  %17 = sfence
  // Predicated region
  $region2: #{triplet_loss.1} parent=0 // pred_check
    _
  $region3: #{triplet_loss.1} parent=0 // pred_check_branch
    %19 = sbr.rel (0) target = $region5
  $region4: #{triplet_loss.1} parent=0 // pred_region
    %s20 = sadd.s32 0, 0
    %p21 = scmp.lt.s32.totalorder %s20, 0
    %s22 = scalar_select %p21, %s20, 0
    %s23 = smul.addr %s22, 8
    %s24 = scalar_lea.vmem %s1, %s23
    %s25 = sadd.s32 0, 0
  $region5: #{triplet_loss.1} parent=0 // pred_fallthru
    _
  // Predicated region
  $region6: #{triplet_loss.1} parent=0 // pred_check
    _
  $region7: #{triplet_loss.1} parent=0 // pred_check_branch
    %27 = sbr.rel (0) target = $region9
  $region8: #{triplet_loss.1} parent=0 // pred_region
    %s28 = sadd.s32 0, 0
    %p29 = scmp.lt.s32.totalorder %s28, 0
    %s30 = scalar_select %p29, %s28, 0
    %s31 = smul.addr %s30, 8
    %s32 = scalar_lea.vmem %s2, %s31
    %s33 = sadd.s32 0, 0
  $region9: #{triplet_loss.1} parent=0 // pred_fallthru
    _
  // Predicated region
  $region10: #{triplet_loss.1} parent=0 // pred_check
    _
  $region11: #{triplet_loss.1} parent=0 // pred_check_branch
    %35 = sbr.rel (0) target = $region13
  $region12: #{triplet_loss.1} parent=0 // pred_region
    %s36 = sadd.s32 0, 0
    %p37 = scmp.lt.s32.totalorder %s36, 0
    %s38 = scalar_select %p37, %s36, 0
    %s39 = smul.addr %s38, 8
    %s40 = scalar_lea.vmem %s3, %s39
    %s41 = sadd.s32 0, 0
  $region13: #{triplet_loss.1} parent=0 // pred_fallthru
    _
  // Predicated region
  $region14: #{triplet_loss.1} parent=0 // pred_check
    _
  $region15: #{triplet_loss.1} parent=0 // pred_check_branch
    %43 = sbr.rel (0) target = $region17
  $region16: #{triplet_loss.1} parent=0 // pred_region
    %s44 = sadd.s32 0, 0
    %p45 = scmp.lt.s32.totalorder %s44, 0
    %s46 = scalar_select %p45, %s44, 0
    %s47 = smul.addr %s46, 8
    %s48 = scalar_lea.vmem %s4, %s47
    %s49 = sadd.s32 0, 0
  $region17: #{triplet_loss.1} parent=0 // pred_fallthru
    _
  // Predicated region
  $region18: #{triplet_loss.1} parent=0 // pred_check
    _
  $region19: #{triplet_loss.1} parent=0 // pred_check_branch
    %51 = sbr.rel (0) target = $region21
  $region20: #{triplet_loss.1} parent=0 // pred_region
    _
  $region21: #{triplet_loss.1} parent=0 // pred_fallthru
    _
  // Predicated region
  $region22: #{triplet_loss.1} parent=0 // pred_check
    _
  $region23: #{triplet_loss.1} parent=0 // pred_check_branch
    %53 = sbr.rel (0) target = $region25
  $region24: #{triplet_loss.1} parent=0 // pred_region
    _
  $region25: #{triplet_loss.1} parent=0 // pred_fallthru
    _
  %s54 = sadd.s32 0, 0
  %p55 = scmp.lt.s32.totalorder %s54, 0
  %s56 = scalar_select %p55, %s54, 0
  %s57 = smul.addr %s56, 8
  %s58 = scalar_lea.vmem %s1, %s57
  %s59 = sadd.s32 0, 0
  %p60 = scmp.lt.s32.totalorder %s59, 0
  %s61 = scalar_select %p60, %s59, 0
  %s62 = smul.addr %s61, 8
  %s63 = scalar_lea.vmem %s2, %s62
  %s64 = sadd.s32 0, 0
  %p65 = scmp.lt.s32.totalorder %s64, 0
  %s66 = scalar_select %p65, %s64, 0
  %s67 = smul.addr %s66, 8
  %s68 = scalar_lea.vmem %s3, %s67
  %s69 = sadd.s32 0, 0
  %p70 = scmp.lt.s32.totalorder %s69, 0
  %s71 = scalar_select %p70, %s69, 0
  %s72 = smul.addr %s71, 8
  %s73 = scalar_lea.vmem %s4, %s72
  %s74 = sadd.s32 0, 0
  %p75 = scmp.lt.s32.totalorder %s74, 0
  %s76 = scalar_select %p75, %s74, 0
  %s77 = smul.addr %s76, 8
  %s78 = scalar_lea.vmem %s1, %s77
  %s79 = sadd.s32 0, 0
  %s80 = sadd.s32 0, 0
  %p81 = scmp.lt.s32.totalorder %s80, 0
  %s82 = scalar_select %p81, %s80, 0
  %s83 = smul.addr %s82, 8
  %s84 = scalar_lea.vmem %s2, %s83
  %s85 = sadd.s32 0, 0
  %s86 = sadd.s32 0, 0
  %p87 = scmp.lt.s32.totalorder %s86, 0
  %s88 = scalar_select %p87, %s86, 0
  %s89 = smul.addr %s88, 8
  %s90 = scalar_lea.vmem %s3, %s89
  %s91 = sadd.s32 0, 0
  %s92 = sadd.s32 0, 0
  %p93 = scmp.lt.s32.totalorder %s92, 0
  %s94 = scalar_select %p93, %s92, 0
  %s95 = smul.addr %s94, 8
  %s96 = scalar_lea.vmem %s4, %s95
  %s97 = sadd.s32 0, 0
  %p98 = scmp.eq.s32.totalorder 0, 0
  // Predicated region
  $region26: #{triplet_loss.1} parent=0 // pred_check
    %p99 = pneg %p98
  $region27: #{triplet_loss.1} parent=0 // pred_check_branch
    %101 = sbr.rel (%p99) target = $region29
  $region28: #{triplet_loss.1} parent=0 // pred_region
    %s102 = scalar_lea.smem [#allocation3], 0
    %103 = sst [smem:[%s102]] 0.0
    %s104 = scalar_lea.smem [#allocation3], 1
    %105 = sst [smem:[%s104]] 0.0
    %106 = vst [vmem:[%s7] sm:$0xff] 0.0
  $region29: #{triplet_loss.1} parent=0 // pred_fallthru
    _
  %v107 = vld [vmem:[%s78] sm:$0xff]
  %v108 = vld [vmem:[%s84] sm:$0xff]
  %v109 = vsub.f32 %v107, %v108
  %v110 = vadd.f32 %v109, 0.2
  %v111 = vmax.f32 %v110, 0.0
  %s112 = sld [smem:[#allocation3]]
  %vm113 = vcmask 130048
  %v114 = vsel %vm113, %v111, 0.0
  %115 = vadd.xlane.f32.xlu0 %v114
  %v116 = vpop.xlane.xlu0 %115
  %v117 = vrot.slane %v116, 4
  %v118 = vadd.f32 %v116, %v117
  %v119 = vrot.slane %v118, 2
  %v120 = vadd.f32 %v118, %v119
  %v121 = vrot.slane %v120, 1
  %v122 = vadd.f32 %v120, %v121
  %s123 = vtos %v122
  %s124 = sadd.f32 %s112, %s123
  %s125 = scalar_lea.smem [#allocation3], 0
  %126 = sst [smem:[%s125]] %s124
  %s127 = sld [smem:[#allocation5 + $0x1]]
  %v128 = vld [vmem:[%s5] sm:$0xff]
  %vm129 = vcmask 261120
  %130 = vst.msk [vmem:[#allocation2] sm:$0xff] %vm129, %v128
  %v131 = vld [vmem:[%s6] sm:$0xff]
  %132 = vst.msk [vmem:[#allocation2 + $0x8] sm:$0xff] %vm129, %v131
  %s133 = ssub.s32 8, %s127
  %s134 = scalar_lea.vmem [#allocation2], %s133
  %v135 = vld [vmem:[%s134] sm:$0xff]
  %v136 = vld [vmem:[%s90] sm:$0xff]
  %v137 = vld [vmem:[%s96] sm:$0xff]
  %v138 = vsub.f32 %v136, %v137
  %v139 = vadd.f32 %v138, 1e-06
  %v140 = vsub.f32 %v136, %v135
  %v141 = vadd.f32 %v140, 1e-06
  %v142 = vmul.f32 %v139, %v139
  %v143 = vsel %vm129, %v142, 0.0
  %144 = vadd.xlane.f32.xlu0 %v143
  %v145 = vpop.xlane.xlu0 %144
  %v146 = vrsqrt.pop %v145
  %v147 = vmul.f32 %v145, %v146
  %vm148 = vcmp.eq.f32.partialorder %v145, inf
  %v149 = vsel %vm148, %v145, %v147
  %vm150 = vcmp.eq.f32.partialorder %v145, 0.0
  %v151 = vand.u32 %v145, 2147483648
  %v152 = vsel %vm150, %v151, %v149
  %v153 = vmul.f32 %v141, %v141
  %v154 = vsel %vm129, %v153, 0.0
  %155 = vadd.xlane.f32.xlu0 %v154
  %v156 = vpop.xlane.xlu0 %155
  %v157 = vrsqrt.pop %v156
  %v158 = vmul.f32 %v156, %v157
  %vm159 = vcmp.eq.f32.partialorder %v156, inf
  %v160 = vsel %vm159, %v156, %v158
  %vm161 = vcmp.eq.f32.partialorder %v156, 0.0
  %v162 = vand.u32 %v156, 2147483648
  %v163 = vsel %vm161, %v162, %v160
  %s164 = sld [smem:[#allocation3 + $0x1]]
  %v165 = vsub.f32 %v152, %v163
  %v166 = vadd.f32 %v165, 0.2
  %v167 = vmax.f32 %v166, 0.0
  %vm168 = vcmask 7168
  %v169 = vsel %vm168, %v167, 0.0
  %170 = vadd.xlane.f32.xlu0 %v169
  %v171 = vpop.xlane.xlu0 %170
  %v172 = vrot.slane %v171, 4
  %v173 = vadd.f32 %v171, %v172
  %v174 = vrot.slane %v173, 2
  %v175 = vadd.f32 %v173, %v174
  %v176 = vrot.slane %v175, 1
  %v177 = vadd.f32 %v175, %v176
  %s178 = vtos %v177
  %s179 = sadd.f32 %s164, %s178
  %s180 = scalar_lea.smem [#allocation3], 1
  %181 = sst [smem:[%s180]] %s179
  // Predicated region
  $region30: #{triplet_loss.1} parent=0 // pred_check
    %p182 = pneg %p98
  $region31: #{triplet_loss.1} parent=0 // pred_check_branch
    %184 = sbr.rel (%p182) target = $region33
  $region32: #{triplet_loss.1} parent=0 // pred_region
    %s185 = sld [smem:[#allocation3]]
    %v186 = vstv %s185
    %187 = vst [vmem:[%s7] sm:$0x1] %v186
    %s188 = sld [smem:[#allocation3 + $0x1]]
    %v189 = vstv %s188
    %190 = vst [vmem:[%s7 + $0x1] sm:$0x1] %v189
  $region33: #{triplet_loss.1} parent=0 // pred_fallthru
    _
  // Predicated region
  $region34: #{triplet_loss.1} parent=0 // pred_check
    _
  $region35: #{triplet_loss.1} parent=0 // pred_check_branch
    %192 = sbr.rel (0) target = $region37
  $region36: #{triplet_loss.1} parent=0 // pred_region
    _
  $region37: #{triplet_loss.1} parent=0 // pred_fallthru
    _
  // Predicated region
  $region38: #{triplet_loss.1} parent=0 // pred_check
    _
  $region39: #{triplet_loss.1} parent=0 // pred_check_branch
    %194 = sbr.rel (0) target = $region41
  $region40: #{triplet_loss.1} parent=0 // pred_region
    _
  $region41: #{triplet_loss.1} parent=0 // pred_fallthru
    _

</llo_original>
